<compile_context>
chip_gen: v5e
topology: v5e:2x2
jax: 0.10.0
libtpu: 0.0.40
codegen_flags: <defaults>
</compile_context>

<pallas_src>
import numpy as np
import jax
import jax.numpy as jnp
from jax.experimental import pallas as pl
from jax.experimental.pallas import tpu as pltpu

BN_EPS = 1e-5
SCALE = float(np.sqrt(np.float32(0.5)))  # torch.sqrt(torch.FloatTensor([0.5]))
LANE = 128


def _round_up(n, m):
    return ((n + m - 1) // m) * m


def _bn_glu_half(x, wa, wg, ga, gg, ba, bg):
    """Linear (bias-free) -> BatchNorm1d (training stats, affine folded) -> GLU,
    with the value/gate halves pre-split so there is no in-kernel lane slicing."""
    ya = jnp.dot(x, wa, preferred_element_type=jnp.float32)   # MXU
    yg = jnp.dot(x, wg, preferred_element_type=jnp.float32)   # MXU

    def bn(y, gamma, beta):
        mean = jnp.mean(y, axis=0, keepdims=True)
        var = jnp.mean(jnp.square(y - mean), axis=0, keepdims=True)  # biased variance
        scale = gamma * jax.lax.rsqrt(var + jnp.float32(BN_EPS))
        shift = beta - mean * scale
        return y * scale + shift            # single fused mul-add per element

    return bn(ya, ga, ba) * jax.nn.sigmoid(bn(yg, gg, bg))


def make_fused_kernel(n_layers):
    """Fused kernel: x + 6 params per layer as inputs, one lane-dense output."""

    def kernel(*refs):
        x_ref, o_ref = refs[0], refs[-1]
        p = refs[1:-1]
        h = x_ref[...]
        for i in range(n_layers):           # statically unrolled; h never leaves VMEM/vregs
            wa, wg, ga, gg, ba, bg = [r[...] for r in p[6 * i:6 * (i + 1)]]
            glu = _bn_glu_half(h, wa, wg, ga, gg, ba, bg)
            h = glu if i == 0 else (h + glu) * jnp.float32(SCALE)
        o_ref[...] = h.astype(o_ref.dtype)  # unmasked, lane-dense store

    return kernel


def prepare_params(params):
    """Split each layer's (w, b, gamma, beta) into value/gate halves, DROP the linear
    bias (exactly cancelled by BN's batch-mean subtraction), and zero-pad the GLU
    feature axis (and, for layers >= 1, the input axis) to a 128-lane multiple.
    Padded BN columns use gamma=1, beta=0 so they stay exactly 0 end-to-end."""
    out_size = params[0][0].shape[1]
    half = out_size // 2
    hp = _round_up(max(half, LANE), LANE)
    pad_n = hp - half

    flat = []
    for i, (w, _b, gamma, beta) in enumerate(params):
        wa, wg = w[:, :half], w[:, half:]
        ga, gg = gamma[:, :half], gamma[:, half:]
        ba, bg = beta[:, :half], beta[:, half:]

        def pn(a, v=0.0):
            return jnp.pad(a, ((0, 0), (0, pad_n)), constant_values=v)

        wa, wg = pn(wa), pn(wg)
        ga, gg = pn(ga, 1.0), pn(gg, 1.0)
        ba, bg = pn(ba), pn(bg)

        if i > 0:  # this layer consumes the padded [B, hp] activation -> pad K with zero rows
            pad_k = hp - wa.shape[0]
            wa = jnp.pad(wa, ((0, pad_k), (0, 0)))
            wg = jnp.pad(wg, ((0, pad_k), (0, 0)))

        flat += [wa, wg, ga, gg, ba, bg]
    return flat, half, hp


def feature_transformer(x, params):
    """params: list of (w [in,out], b [1,out], gamma [1,out], beta [1,out])."""
    flat, half, hp = prepare_params(params)
    n = len(params)
    B = x.shape[0]
    vmem = pl.BlockSpec(memory_space=pltpu.MemorySpace.VMEM)
    out = pl.pallas_call(
        make_fused_kernel(n),
        out_shape=jax.ShapeDtypeStruct((B, hp), jnp.float32),
        in_specs=[vmem] * (1 + 6 * n),
        out_specs=vmem,
    )(x, *flat)
    return out[:, :half]   # strip lane padding (padded columns are exactly zero)


# ------------------------- pure-JAX reference (spec) -------------------------

def feature_transformer_ref(x, params):
    def glu_layer(h, w, b, gamma, beta):
        y = h @ w + b
        mean = jnp.mean(y, axis=0, keepdims=True)
        var = jnp.mean(jnp.square(y - mean), axis=0, keepdims=True)
        y = (y - mean) * jax.lax.rsqrt(var + jnp.float32(BN_EPS)) * gamma + beta
        half = y.shape[-1] // 2
        return y[:, :half] * jax.nn.sigmoid(y[:, half:])

    w, b, g, be = params[0]
    h = glu_layer(x, w, b, g, be)
    for (w, b, g, be) in params[1:]:
        h = (h + glu_layer(h, w, b, g, be)) * jnp.float32(SCALE)
    return h


def init_params(key, nrof_glu, input_size, output_size):
    """Deterministic synthetic init. Linear: Xavier-uniform-like; BN: gamma=1, beta=0."""
    params = []
    for i in range(nrof_glu):
        key, wk, bk = jax.random.split(key, 3)
        fan_in = input_size[i]
        bound = float(np.sqrt(6.0 / (fan_in + output_size)))
        w = jax.random.uniform(
            wk, (fan_in, output_size), jnp.float32, minval=-bound, maxval=bound
        )
        b = jax.random.uniform(
            bk, (1, output_size), jnp.float32, minval=-0.1, maxval=0.1
        )
        gamma = jnp.ones((1, output_size), jnp.float32)
        beta = jnp.zeros((1, output_size), jnp.float32)
        params.append((w, b, gamma, beta))
    return params


if __name__ == "__main__":
    # Shapes consistent with the module:
    #   nrof_glu=3, output_size=64 -> GLU output width 32,
    #   input_size = [16, 32, 32]  (layers 1.. consume the previous GLU output).
    B = 8
    nrof_glu = 3
    output_size = 64
    input_size = [16, output_size // 2, output_size // 2]

    key = jax.random.PRNGKey(0)
    key, xk = jax.random.split(key)
    x = jax.random.normal(xk, (B, input_size[0]), jnp.float32)
    params = init_params(key, nrof_glu, input_size, output_size)

    out = jax.block_until_ready(feature_transformer(x, params))
    ref = jax.block_until_ready(feature_transformer_ref(x, params))

    assert out.shape == (B, output_size // 2), out.shape
    assert jnp.all(jnp.isfinite(out))
    assert jnp.allclose(out, ref, atol=1e-3, rtol=1e-3), float(jnp.max(jnp.abs(out - ref)))
    print("KERNEL_OK")
</pallas_src>

<mosaic_0001>
module attributes {stable_mosaic.version = 11 : i64} {
  func.func @kernel(%arg0: memref<8x16xf32, #tpu.memory_space<vmem>>, %arg1: memref<16x128xf32, #tpu.memory_space<vmem>>, %arg2: memref<16x128xf32, #tpu.memory_space<vmem>>, %arg3: memref<1x128xf32, #tpu.memory_space<vmem>>, %arg4: memref<1x128xf32, #tpu.memory_space<vmem>>, %arg5: memref<1x128xf32, #tpu.memory_space<vmem>>, %arg6: memref<1x128xf32, #tpu.memory_space<vmem>>, %arg7: memref<128x128xf32, #tpu.memory_space<vmem>>, %arg8: memref<128x128xf32, #tpu.memory_space<vmem>>, %arg9: memref<1x128xf32, #tpu.memory_space<vmem>>, %arg10: memref<1x128xf32, #tpu.memory_space<vmem>>, %arg11: memref<1x128xf32, #tpu.memory_space<vmem>>, %arg12: memref<1x128xf32, #tpu.memory_space<vmem>>, %arg13: memref<128x128xf32, #tpu.memory_space<vmem>>, %arg14: memref<128x128xf32, #tpu.memory_space<vmem>>, %arg15: memref<1x128xf32, #tpu.memory_space<vmem>>, %arg16: memref<1x128xf32, #tpu.memory_space<vmem>>, %arg17: memref<1x128xf32, #tpu.memory_space<vmem>>, %arg18: memref<1x128xf32, #tpu.memory_space<vmem>>, %arg19: memref<8x128xf32, #tpu.memory_space<vmem>>) attributes {dimension_semantics = [], scalar_prefetch = 0 : i64, scratch_operands = 0 : i64, tpu.core_type = #tpu.core_type<tc>} {
    %c0 = arith.constant 0 : index
    %c0_0 = arith.constant 0 : index
    %0 = vector.load %arg0[%c0, %c0_0] : memref<8x16xf32, #tpu.memory_space<vmem>>, vector<8x16xf32>
    %c0_1 = arith.constant 0 : index
    %c0_2 = arith.constant 0 : index
    %1 = vector.load %arg1[%c0_1, %c0_2] : memref<16x128xf32, #tpu.memory_space<vmem>>, vector<16x128xf32>
    %c0_3 = arith.constant 0 : index
    %c0_4 = arith.constant 0 : index
    %2 = vector.load %arg2[%c0_3, %c0_4] : memref<16x128xf32, #tpu.memory_space<vmem>>, vector<16x128xf32>
    %c0_5 = arith.constant 0 : index
    %c0_6 = arith.constant 0 : index
    %3 = vector.load %arg3[%c0_5, %c0_6] : memref<1x128xf32, #tpu.memory_space<vmem>>, vector<1x128xf32>
    %c0_7 = arith.constant 0 : index
    %c0_8 = arith.constant 0 : index
    %4 = vector.load %arg4[%c0_7, %c0_8] : memref<1x128xf32, #tpu.memory_space<vmem>>, vector<1x128xf32>
    %c0_9 = arith.constant 0 : index
    %c0_10 = arith.constant 0 : index
    %5 = vector.load %arg5[%c0_9, %c0_10] : memref<1x128xf32, #tpu.memory_space<vmem>>, vector<1x128xf32>
    %c0_11 = arith.constant 0 : index
    %c0_12 = arith.constant 0 : index
    %6 = vector.load %arg6[%c0_11, %c0_12] : memref<1x128xf32, #tpu.memory_space<vmem>>, vector<1x128xf32>
    %cst = arith.constant dense<0.000000e+00> : vector<8x128xf32>
    %7 = tpu.matmul %0, %1, %cst {dimension_numbers = #tpu.dot_dimension_numbers<[1], [0], [0], [1], [0, 0, 1, 1], [], []>} : vector<8x16xf32>, vector<16x128xf32>, vector<8x128xf32> -> vector<8x128xf32>
    %cst_13 = arith.constant dense<0.000000e+00> : vector<8x128xf32>
    %8 = tpu.matmul %0, %2, %cst_13 {dimension_numbers = #tpu.dot_dimension_numbers<[1], [0], [0], [1], [0, 0, 1, 1], [], []>} : vector<8x16xf32>, vector<16x128xf32>, vector<8x128xf32> -> vector<8x128xf32>
    %cst_14 = arith.constant dense<0.000000e+00> : vector<128xf32>
    %9 = vector.multi_reduction <add>, %7, %cst_14 [0] : vector<8x128xf32> to vector<128xf32>
    %10 = vector.shape_cast %9 : vector<128xf32> to vector<1x128xf32>
    %cst_15 = arith.constant 8.000000e+00 : f32
    %11 = vector.broadcast %cst_15 : f32 to vector<1x128xf32>
    %12 = arith.divf %10, %11 : vector<1x128xf32>
    %13 = vector.broadcast %12 : vector<1x128xf32> to vector<8x128xf32>
    %14 = arith.subf %7, %13 : vector<8x128xf32>
    %15 = arith.mulf %14, %14 : vector<8x128xf32>
    %cst_16 = arith.constant dense<0.000000e+00> : vector<128xf32>
    %16 = vector.multi_reduction <add>, %15, %cst_16 [0] : vector<8x128xf32> to vector<128xf32>
    %17 = vector.shape_cast %16 : vector<128xf32> to vector<1x128xf32>
    %cst_17 = arith.constant 8.000000e+00 : f32
    %18 = vector.broadcast %cst_17 : f32 to vector<1x128xf32>
    %19 = arith.divf %17, %18 : vector<1x128xf32>
    %cst_18 = arith.constant 9.99999974E-6 : f32
    %20 = vector.broadcast %cst_18 : f32 to vector<1x128xf32>
    %21 = arith.addf %19, %20 : vector<1x128xf32>
    %22 = math.rsqrt %21 : vector<1x128xf32>
    %23 = arith.mulf %3, %22 : vector<1x128xf32>
    %24 = arith.mulf %12, %23 : vector<1x128xf32>
    %25 = arith.subf %5, %24 : vector<1x128xf32>
    %26 = vector.broadcast %23 : vector<1x128xf32> to vector<8x128xf32>
    %27 = arith.mulf %7, %26 : vector<8x128xf32>
    %28 = vector.broadcast %25 : vector<1x128xf32> to vector<8x128xf32>
    %29 = arith.addf %27, %28 : vector<8x128xf32>
    %cst_19 = arith.constant dense<0.000000e+00> : vector<128xf32>
    %30 = vector.multi_reduction <add>, %8, %cst_19 [0] : vector<8x128xf32> to vector<128xf32>
    %31 = vector.shape_cast %30 : vector<128xf32> to vector<1x128xf32>
    %cst_20 = arith.constant 8.000000e+00 : f32
    %32 = vector.broadcast %cst_20 : f32 to vector<1x128xf32>
    %33 = arith.divf %31, %32 : vector<1x128xf32>
    %34 = vector.broadcast %33 : vector<1x128xf32> to vector<8x128xf32>
    %35 = arith.subf %8, %34 : vector<8x128xf32>
    %36 = arith.mulf %35, %35 : vector<8x128xf32>
    %cst_21 = arith.constant dense<0.000000e+00> : vector<128xf32>
    %37 = vector.multi_reduction <add>, %36, %cst_21 [0] : vector<8x128xf32> to vector<128xf32>
    %38 = vector.shape_cast %37 : vector<128xf32> to vector<1x128xf32>
    %cst_22 = arith.constant 8.000000e+00 : f32
    %39 = vector.broadcast %cst_22 : f32 to vector<1x128xf32>
    %40 = arith.divf %38, %39 : vector<1x128xf32>
    %cst_23 = arith.constant 9.99999974E-6 : f32
    %41 = vector.broadcast %cst_23 : f32 to vector<1x128xf32>
    %42 = arith.addf %40, %41 : vector<1x128xf32>
    %43 = math.rsqrt %42 : vector<1x128xf32>
    %44 = arith.mulf %4, %43 : vector<1x128xf32>
    %45 = arith.mulf %33, %44 : vector<1x128xf32>
    %46 = arith.subf %6, %45 : vector<1x128xf32>
    %47 = vector.broadcast %44 : vector<1x128xf32> to vector<8x128xf32>
    %48 = arith.mulf %8, %47 : vector<8x128xf32>
    %49 = vector.broadcast %46 : vector<1x128xf32> to vector<8x128xf32>
    %50 = arith.addf %48, %49 : vector<8x128xf32>
    %51 = arith.negf %50 : vector<8x128xf32>
    %52 = math.exp %51 : vector<8x128xf32>
    %cst_24 = arith.constant 1.000000e+00 : f32
    %53 = vector.broadcast %cst_24 : f32 to vector<8x128xf32>
    %54 = arith.addf %53, %52 : vector<8x128xf32>
    %55 = arith.divf %53, %54 : vector<8x128xf32>
    %56 = arith.mulf %29, %55 : vector<8x128xf32>
    %c0_25 = arith.constant 0 : index
    %c0_26 = arith.constant 0 : index
    %57 = vector.load %arg7[%c0_25, %c0_26] : memref<128x128xf32, #tpu.memory_space<vmem>>, vector<128x128xf32>
    %c0_27 = arith.constant 0 : index
    %c0_28 = arith.constant 0 : index
    %58 = vector.load %arg8[%c0_27, %c0_28] : memref<128x128xf32, #tpu.memory_space<vmem>>, vector<128x128xf32>
    %c0_29 = arith.constant 0 : index
    %c0_30 = arith.constant 0 : index
    %59 = vector.load %arg9[%c0_29, %c0_30] : memref<1x128xf32, #tpu.memory_space<vmem>>, vector<1x128xf32>
    %c0_31 = arith.constant 0 : index
    %c0_32 = arith.constant 0 : index
    %60 = vector.load %arg10[%c0_31, %c0_32] : memref<1x128xf32, #tpu.memory_space<vmem>>, vector<1x128xf32>
    %c0_33 = arith.constant 0 : index
    %c0_34 = arith.constant 0 : index
    %61 = vector.load %arg11[%c0_33, %c0_34] : memref<1x128xf32, #tpu.memory_space<vmem>>, vector<1x128xf32>
    %c0_35 = arith.constant 0 : index
    %c0_36 = arith.constant 0 : index
    %62 = vector.load %arg12[%c0_35, %c0_36] : memref<1x128xf32, #tpu.memory_space<vmem>>, vector<1x128xf32>
    %cst_37 = arith.constant dense<0.000000e+00> : vector<8x128xf32>
    %63 = tpu.matmul %56, %57, %cst_37 {dimension_numbers = #tpu.dot_dimension_numbers<[1], [0], [0], [1], [0, 0, 1, 1], [], []>} : vector<8x128xf32>, vector<128x128xf32>, vector<8x128xf32> -> vector<8x128xf32>
    %cst_38 = arith.constant dense<0.000000e+00> : vector<8x128xf32>
    %64 = tpu.matmul %56, %58, %cst_38 {dimension_numbers = #tpu.dot_dimension_numbers<[1], [0], [0], [1], [0, 0, 1, 1], [], []>} : vector<8x128xf32>, vector<128x128xf32>, vector<8x128xf32> -> vector<8x128xf32>
    %cst_39 = arith.constant dense<0.000000e+00> : vector<128xf32>
    %65 = vector.multi_reduction <add>, %63, %cst_39 [0] : vector<8x128xf32> to vector<128xf32>
    %66 = vector.shape_cast %65 : vector<128xf32> to vector<1x128xf32>
    %cst_40 = arith.constant 8.000000e+00 : f32
    %67 = vector.broadcast %cst_40 : f32 to vector<1x128xf32>
    %68 = arith.divf %66, %67 : vector<1x128xf32>
    %69 = vector.broadcast %68 : vector<1x128xf32> to vector<8x128xf32>
    %70 = arith.subf %63, %69 : vector<8x128xf32>
    %71 = arith.mulf %70, %70 : vector<8x128xf32>
    %cst_41 = arith.constant dense<0.000000e+00> : vector<128xf32>
    %72 = vector.multi_reduction <add>, %71, %cst_41 [0] : vector<8x128xf32> to vector<128xf32>
    %73 = vector.shape_cast %72 : vector<128xf32> to vector<1x128xf32>
    %cst_42 = arith.constant 8.000000e+00 : f32
    %74 = vector.broadcast %cst_42 : f32 to vector<1x128xf32>
    %75 = arith.divf %73, %74 : vector<1x128xf32>
    %cst_43 = arith.constant 9.99999974E-6 : f32
    %76 = vector.broadcast %cst_43 : f32 to vector<1x128xf32>
    %77 = arith.addf %75, %76 : vector<1x128xf32>
    %78 = math.rsqrt %77 : vector<1x128xf32>
    %79 = arith.mulf %59, %78 : vector<1x128xf32>
    %80 = arith.mulf %68, %79 : vector<1x128xf32>
    %81 = arith.subf %61, %80 : vector<1x128xf32>
    %82 = vector.broadcast %79 : vector<1x128xf32> to vector<8x128xf32>
    %83 = arith.mulf %63, %82 : vector<8x128xf32>
    %84 = vector.broadcast %81 : vector<1x128xf32> to vector<8x128xf32>
    %85 = arith.addf %83, %84 : vector<8x128xf32>
    %cst_44 = arith.constant dense<0.000000e+00> : vector<128xf32>
    %86 = vector.multi_reduction <add>, %64, %cst_44 [0] : vector<8x128xf32> to vector<128xf32>
    %87 = vector.shape_cast %86 : vector<128xf32> to vector<1x128xf32>
    %cst_45 = arith.constant 8.000000e+00 : f32
    %88 = vector.broadcast %cst_45 : f32 to vector<1x128xf32>
    %89 = arith.divf %87, %88 : vector<1x128xf32>
    %90 = vector.broadcast %89 : vector<1x128xf32> to vector<8x128xf32>
    %91 = arith.subf %64, %90 : vector<8x128xf32>
    %92 = arith.mulf %91, %91 : vector<8x128xf32>
    %cst_46 = arith.constant dense<0.000000e+00> : vector<128xf32>
    %93 = vector.multi_reduction <add>, %92, %cst_46 [0] : vector<8x128xf32> to vector<128xf32>
    %94 = vector.shape_cast %93 : vector<128xf32> to vector<1x128xf32>
    %cst_47 = arith.constant 8.000000e+00 : f32
    %95 = vector.broadcast %cst_47 : f32 to vector<1x128xf32>
    %96 = arith.divf %94, %95 : vector<1x128xf32>
    %cst_48 = arith.constant 9.99999974E-6 : f32
    %97 = vector.broadcast %cst_48 : f32 to vector<1x128xf32>
    %98 = arith.addf %96, %97 : vector<1x128xf32>
    %99 = math.rsqrt %98 : vector<1x128xf32>
    %100 = arith.mulf %60, %99 : vector<1x128xf32>
    %101 = arith.mulf %89, %100 : vector<1x128xf32>
    %102 = arith.subf %62, %101 : vector<1x128xf32>
    %103 = vector.broadcast %100 : vector<1x128xf32> to vector<8x128xf32>
    %104 = arith.mulf %64, %103 : vector<8x128xf32>
    %105 = vector.broadcast %102 : vector<1x128xf32> to vector<8x128xf32>
    %106 = arith.addf %104, %105 : vector<8x128xf32>
    %107 = arith.negf %106 : vector<8x128xf32>
    %108 = math.exp %107 : vector<8x128xf32>
    %cst_49 = arith.constant 1.000000e+00 : f32
    %109 = vector.broadcast %cst_49 : f32 to vector<8x128xf32>
    %110 = arith.addf %109, %108 : vector<8x128xf32>
    %111 = arith.divf %109, %110 : vector<8x128xf32>
    %112 = arith.mulf %85, %111 : vector<8x128xf32>
    %113 = arith.addf %56, %112 : vector<8x128xf32>
    %cst_50 = arith.constant 0.707106769 : f32
    %114 = vector.broadcast %cst_50 : f32 to vector<8x128xf32>
    %115 = arith.mulf %113, %114 : vector<8x128xf32>
    %c0_51 = arith.constant 0 : index
    %c0_52 = arith.constant 0 : index
    %116 = vector.load %arg13[%c0_51, %c0_52] : memref<128x128xf32, #tpu.memory_space<vmem>>, vector<128x128xf32>
    %c0_53 = arith.constant 0 : index
    %c0_54 = arith.constant 0 : index
    %117 = vector.load %arg14[%c0_53, %c0_54] : memref<128x128xf32, #tpu.memory_space<vmem>>, vector<128x128xf32>
    %c0_55 = arith.constant 0 : index
    %c0_56 = arith.constant 0 : index
    %118 = vector.load %arg15[%c0_55, %c0_56] : memref<1x128xf32, #tpu.memory_space<vmem>>, vector<1x128xf32>
    %c0_57 = arith.constant 0 : index
    %c0_58 = arith.constant 0 : index
    %119 = vector.load %arg16[%c0_57, %c0_58] : memref<1x128xf32, #tpu.memory_space<vmem>>, vector<1x128xf32>
    %c0_59 = arith.constant 0 : index
    %c0_60 = arith.constant 0 : index
    %120 = vector.load %arg17[%c0_59, %c0_60] : memref<1x128xf32, #tpu.memory_space<vmem>>, vector<1x128xf32>
    %c0_61 = arith.constant 0 : index
    %c0_62 = arith.constant 0 : index
    %121 = vector.load %arg18[%c0_61, %c0_62] : memref<1x128xf32, #tpu.memory_space<vmem>>, vector<1x128xf32>
    %cst_63 = arith.constant dense<0.000000e+00> : vector<8x128xf32>
    %122 = tpu.matmul %115, %116, %cst_63 {dimension_numbers = #tpu.dot_dimension_numbers<[1], [0], [0], [1], [0, 0, 1, 1], [], []>} : vector<8x128xf32>, vector<128x128xf32>, vector<8x128xf32> -> vector<8x128xf32>
    %cst_64 = arith.constant dense<0.000000e+00> : vector<8x128xf32>
    %123 = tpu.matmul %115, %117, %cst_64 {dimension_numbers = #tpu.dot_dimension_numbers<[1], [0], [0], [1], [0, 0, 1, 1], [], []>} : vector<8x128xf32>, vector<128x128xf32>, vector<8x128xf32> -> vector<8x128xf32>
    %cst_65 = arith.constant dense<0.000000e+00> : vector<128xf32>
    %124 = vector.multi_reduction <add>, %122, %cst_65 [0] : vector<8x128xf32> to vector<128xf32>
    %125 = vector.shape_cast %124 : vector<128xf32> to vector<1x128xf32>
    %cst_66 = arith.constant 8.000000e+00 : f32
    %126 = vector.broadcast %cst_66 : f32 to vector<1x128xf32>
    %127 = arith.divf %125, %126 : vector<1x128xf32>
    %128 = vector.broadcast %127 : vector<1x128xf32> to vector<8x128xf32>
    %129 = arith.subf %122, %128 : vector<8x128xf32>
    %130 = arith.mulf %129, %129 : vector<8x128xf32>
    %cst_67 = arith.constant dense<0.000000e+00> : vector<128xf32>
    %131 = vector.multi_reduction <add>, %130, %cst_67 [0] : vector<8x128xf32> to vector<128xf32>
    %132 = vector.shape_cast %131 : vector<128xf32> to vector<1x128xf32>
    %cst_68 = arith.constant 8.000000e+00 : f32
    %133 = vector.broadcast %cst_68 : f32 to vector<1x128xf32>
    %134 = arith.divf %132, %133 : vector<1x128xf32>
    %cst_69 = arith.constant 9.99999974E-6 : f32
    %135 = vector.broadcast %cst_69 : f32 to vector<1x128xf32>
    %136 = arith.addf %134, %135 : vector<1x128xf32>
    %137 = math.rsqrt %136 : vector<1x128xf32>
    %138 = arith.mulf %118, %137 : vector<1x128xf32>
    %139 = arith.mulf %127, %138 : vector<1x128xf32>
    %140 = arith.subf %120, %139 : vector<1x128xf32>
    %141 = vector.broadcast %138 : vector<1x128xf32> to vector<8x128xf32>
    %142 = arith.mulf %122, %141 : vector<8x128xf32>
    %143 = vector.broadcast %140 : vector<1x128xf32> to vector<8x128xf32>
    %144 = arith.addf %142, %143 : vector<8x128xf32>
    %cst_70 = arith.constant dense<0.000000e+00> : vector<128xf32>
    %145 = vector.multi_reduction <add>, %123, %cst_70 [0] : vector<8x128xf32> to vector<128xf32>
    %146 = vector.shape_cast %145 : vector<128xf32> to vector<1x128xf32>
    %cst_71 = arith.constant 8.000000e+00 : f32
    %147 = vector.broadcast %cst_71 : f32 to vector<1x128xf32>
    %148 = arith.divf %146, %147 : vector<1x128xf32>
    %149 = vector.broadcast %148 : vector<1x128xf32> to vector<8x128xf32>
    %150 = arith.subf %123, %149 : vector<8x128xf32>
    %151 = arith.mulf %150, %150 : vector<8x128xf32>
    %cst_72 = arith.constant dense<0.000000e+00> : vector<128xf32>
    %152 = vector.multi_reduction <add>, %151, %cst_72 [0] : vector<8x128xf32> to vector<128xf32>
    %153 = vector.shape_cast %152 : vector<128xf32> to vector<1x128xf32>
    %cst_73 = arith.constant 8.000000e+00 : f32
    %154 = vector.broadcast %cst_73 : f32 to vector<1x128xf32>
    %155 = arith.divf %153, %154 : vector<1x128xf32>
    %cst_74 = arith.constant 9.99999974E-6 : f32
    %156 = vector.broadcast %cst_74 : f32 to vector<1x128xf32>
    %157 = arith.addf %155, %156 : vector<1x128xf32>
    %158 = math.rsqrt %157 : vector<1x128xf32>
    %159 = arith.mulf %119, %158 : vector<1x128xf32>
    %160 = arith.mulf %148, %159 : vector<1x128xf32>
    %161 = arith.subf %121, %160 : vector<1x128xf32>
    %162 = vector.broadcast %159 : vector<1x128xf32> to vector<8x128xf32>
    %163 = arith.mulf %123, %162 : vector<8x128xf32>
    %164 = vector.broadcast %161 : vector<1x128xf32> to vector<8x128xf32>
    %165 = arith.addf %163, %164 : vector<8x128xf32>
    %166 = arith.negf %165 : vector<8x128xf32>
    %167 = math.exp %166 : vector<8x128xf32>
    %cst_75 = arith.constant 1.000000e+00 : f32
    %168 = vector.broadcast %cst_75 : f32 to vector<8x128xf32>
    %169 = arith.addf %168, %167 : vector<8x128xf32>
    %170 = arith.divf %168, %169 : vector<8x128xf32>
    %171 = arith.mulf %144, %170 : vector<8x128xf32>
    %172 = arith.addf %115, %171 : vector<8x128xf32>
    %cst_76 = arith.constant 0.707106769 : f32
    %173 = vector.broadcast %cst_76 : f32 to vector<8x128xf32>
    %174 = arith.mulf %172, %173 : vector<8x128xf32>
    %c0_77 = arith.constant 0 : index
    %c0_78 = arith.constant 0 : index
    %175 = vector.load %arg19[%c0_77, %c0_78] : memref<8x128xf32, #tpu.memory_space<vmem>>, vector<8x128xf32>
    tpu.vector_store %arg19[%c0_77, %c0_78], %174 {strides = array<i32>} : memref<8x128xf32, #tpu.memory_space<vmem>>, vector<8x128xf32>,
    return
  }
}

</mosaic_0001>

<llo_original>
// kernel: tpu_custom_call.1
$region0: #{tpu_custom_call.1}
  #allocation0 [shape = 'u32[]', space=smem, size = 0x4, offset = 0x4, fixed_abs, tag = 'smem constant byte address 0x4 - core index']
  #allocation1 [shape = 'u32[72,128]{1,0:T(1,128)}', space=vmem, size = 0x9000, scoped, tag = 'internal scratch']
  %s0 = inlined_call_operand.hbm [shape: f32[8,16], index: 0, kind: input, shape index: {}]
  %s1 = inlined_call_operand.hbm [shape: f32[16,128], index: 1, kind: input, shape index: {}]
  %s2 = inlined_call_operand.hbm [shape: f32[16,128], index: 2, kind: input, shape index: {}]
  %s3 = inlined_call_operand.vmem [shape: f32[1,128], index: 3, kind: input, shape index: {}]
  %s4 = inlined_call_operand.vmem [shape: f32[1,128], index: 4, kind: input, shape index: {}]
  %s5 = inlined_call_operand.vmem [shape: f32[1,128], index: 5, kind: input, shape index: {}]
  %s6 = inlined_call_operand.vmem [shape: f32[1,128], index: 6, kind: input, shape index: {}]
  %s7 = inlined_call_operand.hbm [shape: f32[128,128], index: 7, kind: input, shape index: {}]
  %s8 = inlined_call_operand.hbm [shape: f32[128,128], index: 8, kind: input, shape index: {}]
  %s9 = inlined_call_operand.vmem [shape: f32[1,128], index: 9, kind: input, shape index: {}]
  %s10 = inlined_call_operand.vmem [shape: f32[1,128], index: 10, kind: input, shape index: {}]
  %s11 = inlined_call_operand.vmem [shape: f32[1,128], index: 11, kind: input, shape index: {}]
  %s12 = inlined_call_operand.vmem [shape: f32[1,128], index: 12, kind: input, shape index: {}]
  %s13 = inlined_call_operand.hbm [shape: f32[128,128], index: 13, kind: input, shape index: {}]
  %s14 = inlined_call_operand.hbm [shape: f32[128,128], index: 14, kind: input, shape index: {}]
  %s15 = inlined_call_operand.vmem [shape: f32[1,128], index: 15, kind: input, shape index: {}]
  %s16 = inlined_call_operand.vmem [shape: f32[1,128], index: 16, kind: input, shape index: {}]
  %s17 = inlined_call_operand.vmem [shape: f32[1,128], index: 17, kind: input, shape index: {}]
  %s18 = inlined_call_operand.vmem [shape: f32[1,128], index: 18, kind: input, shape index: {}]
  %s19 = inlined_call_operand.hbm [shape: f32[8,128], index: 19, kind: output, shape index: {}]
  %s20 = sld [smem:[#allocation0]]
  $region114: #{tpu_custom_call.1} parent=0
    _
  %s22 = ssub.s32 1, %s20
  %s23 = scalar_select 0, %s22, %s20
  $region1: #{tpu_custom_call.1} parent=0
    #allocation2 [shape = 'u8[4096]{0}', space=vmem, size = 0x1000, scoped, tag = 'input window, operand 0, single buffered']
    #allocation3 [shape = 's32[1]{0}', space=sflag, size = 0x4, scoped, tag = 'scoped memory for tpu_custom_call.1']
    #allocation4 [shape = 's32[1]{0}', space=sflag, size = 0x4, scoped, tag = 'scoped memory for tpu_custom_call.1']
    #allocation5 [shape = 'u8[8192]{0}', space=vmem, size = 0x2000, scoped, tag = 'input window, operand 1, single buffered']
    #allocation6 [shape = 's32[1]{0}', space=sflag, size = 0x4, scoped, tag = 'scoped memory for tpu_custom_call.1']
    #allocation7 [shape = 'u8[8192]{0}', space=vmem, size = 0x2000, scoped, tag = 'input window, operand 2, single buffered']
    #allocation8 [shape = 'u8[65536]{0}', space=vmem, size = 0x10000, scoped, tag = 'input window, operand 7, single buffered']
    #allocation9 [shape = 's32[1]{0}', space=sflag, size = 0x4, scoped, tag = 'scoped memory for tpu_custom_call.1']
    #allocation10 [shape = 'u8[65536]{0}', space=vmem, size = 0x10000, scoped, tag = 'input window, operand 8, single buffered']
    #allocation11 [shape = 'u8[65536]{0}', space=vmem, size = 0x10000, scoped, tag = 'input window, operand 13, single buffered']
    #allocation12 [shape = 's32[1]{0}', space=sflag, size = 0x4, scoped, tag = 'scoped memory for tpu_custom_call.1']
    #allocation13 [shape = 'u8[65536]{0}', space=vmem, size = 0x10000, scoped, tag = 'input window, operand 14, single buffered']
    #allocation14 [shape = 'u8[4096]{0}', space=vmem, size = 0x1000, scoped, tag = 'output window, operand 0, single buffered']
    %24 = vsyncpa [#allocation3], 0
    %25 = vsyncpa [#allocation6], 0
    %26 = vsyncpa [#allocation9], 0
    %27 = vsyncpa [#allocation12], 0
    %28 = vsyncpa [#allocation4], 0
    // Predicated region
    $region2: #{tpu_custom_call.1} parent=1 // pred_check
      _
    $region3: #{tpu_custom_call.1} parent=1 // pred_check_branch
      %30 = sbr.rel (0) target = $region5
    $region4: #{tpu_custom_call.1} parent=1 // pred_region
      %32 = vsyncadd [#allocation3], 0
      %s34 = sshll.u32 %s0, 4
      %s35 = int_to_ptr.hbm [resolvable:$true] %s34
      %s36 = sshll.u32 [#allocation2], 4
      %s37 = int_to_ptr.vmem [resolvable:$true] %s36
      %39 = dma.hbm_to_vmem [thread:$0]  %s35, 128, %s37, [#allocation3]
    $region5: #{tpu_custom_call.1} parent=1 // pred_fallthru
      _
    // Predicated region
    $region6: #{tpu_custom_call.1} parent=1 // pred_check
      _
    $region7: #{tpu_custom_call.1} parent=1 // pred_check_branch
      %41 = sbr.rel (0) target = $region9
    $region8: #{tpu_custom_call.1} parent=1 // pred_region
      %43 = vsyncadd [#allocation6], 0
      %s44 = sshll.u32 %s1, 4
      %s45 = int_to_ptr.hbm [resolvable:$true] %s44
      %s46 = sshll.u32 [#allocation5], 4
      %s47 = int_to_ptr.vmem [resolvable:$true] %s46
      %52 = dma.hbm_to_vmem [thread:$0]  %s45, 256, %s47, [#allocation6], 128, 128, 8
    $region9: #{tpu_custom_call.1} parent=1 // pred_fallthru
      _
    // Predicated region
    $region10: #{tpu_custom_call.1} parent=1 // pred_check
      _
    $region11: #{tpu_custom_call.1} parent=1 // pred_check_branch
      %54 = sbr.rel (0) target = $region13
    $region12: #{tpu_custom_call.1} parent=1 // pred_region
      %56 = vsyncadd [#allocation6], 0
      %s57 = sshll.u32 %s2, 4
      %s58 = int_to_ptr.hbm [resolvable:$true] %s57
      %s59 = sshll.u32 [#allocation7], 4
      %s60 = int_to_ptr.vmem [resolvable:$true] %s59
      %65 = dma.hbm_to_vmem [thread:$0]  %s58, 256, %s60, [#allocation6], 128, 128, 8
    $region13: #{tpu_custom_call.1} parent=1 // pred_fallthru
      _
    // Predicated region
    $region14: #{tpu_custom_call.1} parent=1 // pred_check
      _
    $region15: #{tpu_custom_call.1} parent=1 // pred_check_branch
      %67 = sbr.rel (0) target = $region17
    $region16: #{tpu_custom_call.1} parent=1 // pred_region
      _
    $region17: #{tpu_custom_call.1} parent=1 // pred_fallthru
      _
    // Predicated region
    $region18: #{tpu_custom_call.1} parent=1 // pred_check
      _
    $region19: #{tpu_custom_call.1} parent=1 // pred_check_branch
      %69 = sbr.rel (0) target = $region21
    $region20: #{tpu_custom_call.1} parent=1 // pred_region
      _
    $region21: #{tpu_custom_call.1} parent=1 // pred_fallthru
      _
    // Predicated region
    $region22: #{tpu_custom_call.1} parent=1 // pred_check
      _
    $region23: #{tpu_custom_call.1} parent=1 // pred_check_branch
      %71 = sbr.rel (0) target = $region25
    $region24: #{tpu_custom_call.1} parent=1 // pred_region
      _
    $region25: #{tpu_custom_call.1} parent=1 // pred_fallthru
      _
    // Predicated region
    $region26: #{tpu_custom_call.1} parent=1 // pred_check
      _
    $region27: #{tpu_custom_call.1} parent=1 // pred_check_branch
      %73 = sbr.rel (0) target = $region29
    $region28: #{tpu_custom_call.1} parent=1 // pred_region
      _
    $region29: #{tpu_custom_call.1} parent=1 // pred_fallthru
      _
    // Predicated region
    $region30: #{tpu_custom_call.1} parent=1 // pred_check
      _
    $region31: #{tpu_custom_call.1} parent=1 // pred_check_branch
      %75 = sbr.rel (0) target = $region33
    $region32: #{tpu_custom_call.1} parent=1 // pred_region
      %77 = vsyncadd [#allocation9], 0
      %s78 = sshll.u32 %s7, 4
      %s79 = int_to_ptr.hbm [resolvable:$true] %s78
      %s80 = sshll.u32 [#allocation8], 4
      %s81 = int_to_ptr.vmem [resolvable:$true] %s80
      %86 = dma.hbm_to_vmem [thread:$0]  %s79, 2048, %s81, [#allocation9], 128, 128, 8
    $region33: #{tpu_custom_call.1} parent=1 // pred_fallthru
      _
    // Predicated region
    $region34: #{tpu_custom_call.1} parent=1 // pred_check
      _
    $region35: #{tpu_custom_call.1} parent=1 // pred_check_branch
      %88 = sbr.rel (0) target = $region37
    $region36: #{tpu_custom_call.1} parent=1 // pred_region
      %90 = vsyncadd [#allocation9], 0
      %s91 = sshll.u32 %s8, 4
      %s92 = int_to_ptr.hbm [resolvable:$true] %s91
      %s93 = sshll.u32 [#allocation10], 4
      %s94 = int_to_ptr.vmem [resolvable:$true] %s93
      %99 = dma.hbm_to_vmem [thread:$0]  %s92, 2048, %s94, [#allocation9], 128, 128, 8
    $region37: #{tpu_custom_call.1} parent=1 // pred_fallthru
      _
    // Predicated region
    $region38: #{tpu_custom_call.1} parent=1 // pred_check
      _
    $region39: #{tpu_custom_call.1} parent=1 // pred_check_branch
      %101 = sbr.rel (0) target = $region41
    $region40: #{tpu_custom_call.1} parent=1 // pred_region
      _
    $region41: #{tpu_custom_call.1} parent=1 // pred_fallthru
      _
    // Predicated region
    $region42: #{tpu_custom_call.1} parent=1 // pred_check
      _
    $region43: #{tpu_custom_call.1} parent=1 // pred_check_branch
      %103 = sbr.rel (0) target = $region45
    $region44: #{tpu_custom_call.1} parent=1 // pred_region
      _
    $region45: #{tpu_custom_call.1} parent=1 // pred_fallthru
      _
    // Predicated region
    $region46: #{tpu_custom_call.1} parent=1 // pred_check
      _
    $region47: #{tpu_custom_call.1} parent=1 // pred_check_branch
      %105 = sbr.rel (0) target = $region49
    $region48: #{tpu_custom_call.1} parent=1 // pred_region
      _
    $region49: #{tpu_custom_call.1} parent=1 // pred_fallthru
      _
    // Predicated region
    $region50: #{tpu_custom_call.1} parent=1 // pred_check
      _
    $region51: #{tpu_custom_call.1} parent=1 // pred_check_branch
      %107 = sbr.rel (0) target = $region53
    $region52: #{tpu_custom_call.1} parent=1 // pred_region
      _
    $region53: #{tpu_custom_call.1} parent=1 // pred_fallthru
      _
    // Predicated region
    $region54: #{tpu_custom_call.1} parent=1 // pred_check
      _
    $region55: #{tpu_custom_call.1} parent=1 // pred_check_branch
      %109 = sbr.rel (0) target = $region57
    $region56: #{tpu_custom_call.1} parent=1 // pred_region
      %111 = vsyncadd [#allocation12], 0
      %s112 = sshll.u32 %s13, 4
      %s113 = int_to_ptr.hbm [resolvable:$true] %s112
      %s114 = sshll.u32 [#allocation11], 4
      %s115 = int_to_ptr.vmem [resolvable:$true] %s114
      %120 = dma.hbm_to_vmem [thread:$0]  %s113, 2048, %s115, [#allocation12], 128, 128, 8
    $region57: #{tpu_custom_call.1} parent=1 // pred_fallthru
      _
    // Predicated region
    $region58: #{tpu_custom_call.1} parent=1 // pred_check
      _
    $region59: #{tpu_custom_call.1} parent=1 // pred_check_branch
      %122 = sbr.rel (0) target = $region61
    $region60: #{tpu_custom_call.1} parent=1 // pred_region
      %124 = vsyncadd [#allocation12], 0
      %s125 = sshll.u32 %s14, 4
      %s126 = int_to_ptr.hbm [resolvable:$true] %s125
      %s127 = sshll.u32 [#allocation13], 4
      %s128 = int_to_ptr.vmem [resolvable:$true] %s127
      %133 = dma.hbm_to_vmem [thread:$0]  %s126, 2048, %s128, [#allocation12], 128, 128, 8
    $region61: #{tpu_custom_call.1} parent=1 // pred_fallthru
      _
    // Predicated region
    $region62: #{tpu_custom_call.1} parent=1 // pred_check
      _
    $region63: #{tpu_custom_call.1} parent=1 // pred_check_branch
      %135 = sbr.rel (0) target = $region65
    $region64: #{tpu_custom_call.1} parent=1 // pred_region
      _
    $region65: #{tpu_custom_call.1} parent=1 // pred_fallthru
      _
    // Predicated region
    $region66: #{tpu_custom_call.1} parent=1 // pred_check
      _
    $region67: #{tpu_custom_call.1} parent=1 // pred_check_branch
      %137 = sbr.rel (0) target = $region69
    $region68: #{tpu_custom_call.1} parent=1 // pred_region
      _
    $region69: #{tpu_custom_call.1} parent=1 // pred_fallthru
      _
    // Predicated region
    $region70: #{tpu_custom_call.1} parent=1 // pred_check
      _
    $region71: #{tpu_custom_call.1} parent=1 // pred_check_branch
      %139 = sbr.rel (0) target = $region73
    $region72: #{tpu_custom_call.1} parent=1 // pred_region
      _
    $region73: #{tpu_custom_call.1} parent=1 // pred_fallthru
      _
    // Predicated region
    $region74: #{tpu_custom_call.1} parent=1 // pred_check
      _
    $region75: #{tpu_custom_call.1} parent=1 // pred_check_branch
      %141 = sbr.rel (0) target = $region77
    $region76: #{tpu_custom_call.1} parent=1 // pred_region
      _
    $region77: #{tpu_custom_call.1} parent=1 // pred_fallthru
      _
    // Predicated region
    $region78: #{tpu_custom_call.1} parent=1 // pred_check
      _
    $region79: #{tpu_custom_call.1} parent=1 // pred_check_branch
      %143 = sbr.rel (0) target = $region81
    $region80: #{tpu_custom_call.1} parent=1 // pred_region
      %145 = dma.done [#allocation3], 128
    $region81: #{tpu_custom_call.1} parent=1 // pred_fallthru
      _
    // Predicated region
    $region82: #{tpu_custom_call.1} parent=1 // pred_check
      _
    $region83: #{tpu_custom_call.1} parent=1 // pred_check_branch
      %147 = sbr.rel (0) target = $region85
    $region84: #{tpu_custom_call.1} parent=1 // pred_region
      %149 = dma.done [#allocation6], 256
    $region85: #{tpu_custom_call.1} parent=1 // pred_fallthru
      _
    // Predicated region
    $region86: #{tpu_custom_call.1} parent=1 // pred_check
      _
    $region87: #{tpu_custom_call.1} parent=1 // pred_check_branch
      %151 = sbr.rel (0) target = $region89
    $region88: #{tpu_custom_call.1} parent=1 // pred_region
      %153 = dma.done [#allocation6], 256
    $region89: #{tpu_custom_call.1} parent=1 // pred_fallthru
      _
    // Predicated region
    $region90: #{tpu_custom_call.1} parent=1 // pred_check
      _
    $region91: #{tpu_custom_call.1} parent=1 // pred_check_branch
      %155 = sbr.rel (0) target = $region93
    $region92: #{tpu_custom_call.1} parent=1 // pred_region
      %157 = dma.done [#allocation9], 2048
    $region93: #{tpu_custom_call.1} parent=1 // pred_fallthru
      _
    // Predicated region
    $region94: #{tpu_custom_call.1} parent=1 // pred_check
      _
    $region95: #{tpu_custom_call.1} parent=1 // pred_check_branch
      %159 = sbr.rel (0) target = $region97
    $region96: #{tpu_custom_call.1} parent=1 // pred_region
      %161 = dma.done [#allocation9], 2048
    $region97: #{tpu_custom_call.1} parent=1 // pred_fallthru
      _
    // Predicated region
    $region98: #{tpu_custom_call.1} parent=1 // pred_check
      _
    $region99: #{tpu_custom_call.1} parent=1 // pred_check_branch
      %163 = sbr.rel (0) target = $region101
    $region100: #{tpu_custom_call.1} parent=1 // pred_region
      %165 = dma.done [#allocation12], 2048
    $region101: #{tpu_custom_call.1} parent=1 // pred_fallthru
      _
    // Predicated region
    $region102: #{tpu_custom_call.1} parent=1 // pred_check
      _
    $region103: #{tpu_custom_call.1} parent=1 // pred_check_branch
      %167 = sbr.rel (0) target = $region105
    $region104: #{tpu_custom_call.1} parent=1 // pred_region
      %169 = dma.done [#allocation12], 2048
    $region105: #{tpu_custom_call.1} parent=1 // pred_fallthru
      _
    %v170 = vld [vmem:[#allocation2] sm:$0xff]
    %v171 = vld [vmem:[#allocation5] sm:$0xff]
    %v172 = vld [vmem:[#allocation5 + $0x8] sm:$0xff]
    %v173 = vld [vmem:[#allocation7] sm:$0xff]
    %v174 = vld [vmem:[#allocation7 + $0x8] sm:$0xff]
    %v175 = vld [vmem:[%s3] sm:$0x1]
    %v176 = vld [vmem:[%s4] sm:$0x1]
    %v177 = vld [vmem:[%s5] sm:$0x1]
    %v178 = vld [vmem:[%s6] sm:$0x1]
    %vm179 = vcmask 130048
    %v181 = vsel %vm179, %v170, 0
    %183 = vmatpush.msra.mxu0 0.0
    %184 = vmatpush.msra.mxu0 0.0
    %185 = vmatpush.msra.mxu0 0.0
    %186 = vmatpush.msra.mxu0 0.0
    %187 = vmatpush.msra.mxu0 0.0
    %188 = vmatpush.msra.mxu0 0.0
    %189 = vmatpush.msra.mxu0 0.0
    %190 = vmatpush.msra.mxu0 0.0
    %191 = vmatpush.msra.mxu0 0.0
    %192 = vmatpush.msra.mxu0 0.0
    %193 = vmatpush.msra.mxu0 0.0
    %194 = vmatpush.msra.mxu0 0.0
    %195 = vmatpush.msra.mxu0 0.0
    %196 = vmatpush.msra.mxu0 0.0
    %197 = vmatpush.msra.mxu0 %v172
    %198 = vmatpush.msra.mxu0 %v171
    %199 = vmatmul.f32.gmra.mxu0 %v181
    %v200 = vpop.f32.mrf.mxu0
    %v201 = vadd.f32 0.0, %v200
    %202 = vdwg.mxu0
    %203 = vmatpush.msra.mxu0 0.0
    %204 = vmatpush.msra.mxu0 0.0
    %205 = vmatpush.msra.mxu0 0.0
    %206 = vmatpush.msra.mxu0 0.0
    %207 = vmatpush.msra.mxu0 0.0
    %208 = vmatpush.msra.mxu0 0.0
    %209 = vmatpush.msra.mxu0 0.0
    %210 = vmatpush.msra.mxu0 0.0
    %211 = vmatpush.msra.mxu0 0.0
    %212 = vmatpush.msra.mxu0 0.0
    %213 = vmatpush.msra.mxu0 0.0
    %214 = vmatpush.msra.mxu0 0.0
    %215 = vmatpush.msra.mxu0 0.0
    %216 = vmatpush.msra.mxu0 0.0
    %217 = vmatpush.msra.mxu0 %v174
    %218 = vmatpush.msra.mxu0 %v173
    %219 = vmatmul.f32.gmra.mxu0 %v181
    %v220 = vpop.f32.mrf.mxu0
    %v221 = vadd.f32 0.0, %v220
    %222 = vdwg.mxu0
    %v223 = vrot.slane %v201, 4
    %v224 = vadd.f32 %v201, %v223
    %v225 = vrot.slane %v224, 2
    %v226 = vadd.f32 %v224, %v225
    %v227 = vrot.slane %v226, 1
    %v228 = vadd.f32 %v226, %v227
    %v229 = vrcp.pop 8.0
    %v230 = vmul.f32 8.0, %v229
    %v231 = vsub.f32 1.0, %v230
    %v232 = vmul.f32 %v229, %v231
    %v233 = vadd.f32 %v229, %v232
    %vm234 = vweird.f32 %v229
    %v235 = vsel %vm234, %v229, %v233
    %v236 = vmul.f32 %v228, %v235
    %v237 = vsub.f32 %v201, %v236
    %v238 = vmul.f32 %v237, %v237
    %v239 = vrot.slane %v238, 4
    %v240 = vadd.f32 %v238, %v239
    %v241 = vrot.slane %v240, 2
    %v242 = vadd.f32 %v240, %v241
    %v243 = vrot.slane %v242, 1
    %v244 = vadd.f32 %v242, %v243
    %v245 = vmul.f32 %v244, %v235
    %v246 = vadd.f32 %v245, 1e-05
    %v247 = vrsqrt.pop %v246
    %v248 = vmul.f32 %v247, %v246
    %v249 = vmul.f32 %v248, %v247
    %v250 = vmul.f32 0.5, %v249
    %v251 = vsub.f32 1.5, %v250
    %v252 = vmul.f32 %v247, %v251
    %vm253 = vweird.f32 %v246
    %vm254 = vweird.f32 %v247
    %vm255 = vmor %vm253, %vm254
    %v256 = vsel %vm255, %v247, %v252
    %v257 = vmul.f32 %v175, %v256
    %v258 = vmul.f32 %v236, %v257
    %v259 = vsub.f32 %v177, %v258
    %v261 = vperm.slane %v257, 0
    %v263 = vmul.f32 %v201, %v261
    %v265 = vperm.slane %v259, 0
    %v267 = vadd.f32 %v263, %v265
    %v268 = vrot.slane %v221, 4
    %v269 = vadd.f32 %v221, %v268
    %v270 = vrot.slane %v269, 2
    %v271 = vadd.f32 %v269, %v270
    %v272 = vrot.slane %v271, 1
    %v273 = vadd.f32 %v271, %v272
    %v274 = vmul.f32 %v273, %v235
    %v275 = vsub.f32 %v221, %v274
    %v276 = vmul.f32 %v275, %v275
    %v277 = vrot.slane %v276, 4
    %v278 = vadd.f32 %v276, %v277
    %v279 = vrot.slane %v278, 2
    %v280 = vadd.f32 %v278, %v279
    %v281 = vrot.slane %v280, 1
    %v282 = vadd.f32 %v280, %v281
    %v283 = vmul.f32 %v282, %v235
    %v284 = vadd.f32 %v283, 1e-05
    %v285 = vrsqrt.pop %v284
    %v286 = vmul.f32 %v285, %v284
    %v287 = vmul.f32 %v286, %v285
    %v288 = vmul.f32 0.5, %v287
    %v289 = vsub.f32 1.5, %v288
    %v290 = vmul.f32 %v285, %v289
    %vm291 = vweird.f32 %v284
    %vm292 = vweird.f32 %v285
    %vm293 = vmor %vm291, %vm292
    %v294 = vsel %vm293, %v285, %v290
    %v295 = vmul.f32 %v176, %v294
    %v296 = vmul.f32 %v274, %v295
    %v297 = vsub.f32 %v178, %v296
    %v299 = vperm.slane %v295, 0
    %v301 = vmul.f32 %v221, %v299
    %v303 = vperm.slane %v297, 0
    %v305 = vadd.f32 %v301, %v303
    %v306 = vxor.u32 %v305, 2147483648
    %v307 = vmul.f32 %v306, 1.442695
    %v308 = vpow.pop %v307
    %v309 = vadd.f32 %v308, 1.0
    %v310 = vrcp.pop %v309
    %v311 = vmul.f32 %v309, %v310
    %v312 = vsub.f32 1.0, %v311
    %v313 = vmul.f32 %v310, %v312
    %v314 = vadd.f32 %v310, %v313
    %vm315 = vweird.f32 %v309
    %vm316 = vweird.f32 %v310
    %vm317 = vmor %vm315, %vm316
    %v318 = vsel %vm317, %v310, %v314
    %v319 = vand.u32 2147483647, %v309
    %vm320 = vcmp.eq.f32.partialorder %v319, 8.507059e+37
    %v321 = vand.u32 %v309, 2147483648
    %v322 = vor.u32 1.1754944e-38, %v321
    %v323 = vsel %vm320, %v322, %v318
    %v324 = vmul.f32 1.0, %v323
    %v325 = vmul.f32 %v267, %v324
    %v326 = vld [vmem:[#allocation8] sm:$0xff]
    %v327 = vld [vmem:[#allocation8 + $0x8] sm:$0xff]
    %v328 = vld [vmem:[#allocation8 + $0x10] sm:$0xff]
    %v329 = vld [vmem:[#allocation8 + $0x18] sm:$0xff]
    %v330 = vld [vmem:[#allocation8 + $0x20] sm:$0xff]
    %v331 = vld [vmem:[#allocation8 + $0x28] sm:$0xff]
    %v332 = vld [vmem:[#allocation8 + $0x30] sm:$0xff]
    %v333 = vld [vmem:[#allocation8 + $0x38] sm:$0xff]
    %v334 = vld [vmem:[#allocation8 + $0x40] sm:$0xff]
    %v335 = vld [vmem:[#allocation8 + $0x48] sm:$0xff]
    %v336 = vld [vmem:[#allocation8 + $0x50] sm:$0xff]
    %v337 = vld [vmem:[#allocation8 + $0x58] sm:$0xff]
    %v338 = vld [vmem:[#allocation8 + $0x60] sm:$0xff]
    %v339 = vld [vmem:[#allocation8 + $0x68] sm:$0xff]
    %v340 = vld [vmem:[#allocation8 + $0x70] sm:$0xff]
    %v341 = vld [vmem:[#allocation8 + $0x78] sm:$0xff]
    %v342 = vld [vmem:[#allocation10] sm:$0xff]
    %v343 = vld [vmem:[#allocation10 + $0x8] sm:$0xff]
    %v344 = vld [vmem:[#allocation10 + $0x10] sm:$0xff]
    %v345 = vld [vmem:[#allocation10 + $0x18] sm:$0xff]
    %v346 = vld [vmem:[#allocation10 + $0x20] sm:$0xff]
    %v347 = vld [vmem:[#allocation10 + $0x28] sm:$0xff]
    %v348 = vld [vmem:[#allocation10 + $0x30] sm:$0xff]
    %v349 = vld [vmem:[#allocation10 + $0x38] sm:$0xff]
    %v350 = vld [vmem:[#allocation10 + $0x40] sm:$0xff]
    %v351 = vld [vmem:[#allocation10 + $0x48] sm:$0xff]
    %v352 = vld [vmem:[#allocation10 + $0x50] sm:$0xff]
    %v353 = vld [vmem:[#allocation10 + $0x58] sm:$0xff]
    %v354 = vld [vmem:[#allocation10 + $0x60] sm:$0xff]
    %v355 = vld [vmem:[#allocation10 + $0x68] sm:$0xff]
    %v356 = vld [vmem:[#allocation10 + $0x70] sm:$0xff]
    %v357 = vld [vmem:[#allocation10 + $0x78] sm:$0xff]
    %v358 = vld [vmem:[%s9] sm:$0x1]
    %v359 = vld [vmem:[%s10] sm:$0x1]
    %v360 = vld [vmem:[%s11] sm:$0x1]
    %v361 = vld [vmem:[%s12] sm:$0x1]
    %362 = vmatpush.msra.mxu0 %v341
    %363 = vmatpush.msra.mxu0 %v340
    %364 = vmatpush.msra.mxu0 %v339
    %365 = vmatpush.msra.mxu0 %v338
    %366 = vmatpush.msra.mxu0 %v337
    %367 = vmatpush.msra.mxu0 %v336
    %368 = vmatpush.msra.mxu0 %v335
    %369 = vmatpush.msra.mxu0 %v334
    %370 = vmatpush.msra.mxu0 %v333
    %371 = vmatpush.msra.mxu0 %v332
    %372 = vmatpush.msra.mxu0 %v331
    %373 = vmatpush.msra.mxu0 %v330
    %374 = vmatpush.msra.mxu0 %v329
    %375 = vmatpush.msra.mxu0 %v328
    %376 = vmatpush.msra.mxu0 %v327
    %377 = vmatpush.msra.mxu0 %v326
    %378 = vmatmul.f32.gmra.mxu0 %v325
    %v379 = vpop.f32.mrf.mxu0
    %v380 = vadd.f32 0.0, %v379
    %381 = vdwg.mxu0
    %382 = vmatpush.msra.mxu0 %v357
    %383 = vmatpush.msra.mxu0 %v356
    %384 = vmatpush.msra.mxu0 %v355
    %385 = vmatpush.msra.mxu0 %v354
    %386 = vmatpush.msra.mxu0 %v353
    %387 = vmatpush.msra.mxu0 %v352
    %388 = vmatpush.msra.mxu0 %v351
    %389 = vmatpush.msra.mxu0 %v350
    %390 = vmatpush.msra.mxu0 %v349
    %391 = vmatpush.msra.mxu0 %v348
    %392 = vmatpush.msra.mxu0 %v347
    %393 = vmatpush.msra.mxu0 %v346
    %394 = vmatpush.msra.mxu0 %v345
    %395 = vmatpush.msra.mxu0 %v344
    %396 = vmatpush.msra.mxu0 %v343
    %397 = vmatpush.msra.mxu0 %v342
    %398 = vmatmul.f32.gmra.mxu0 %v325
    %v399 = vpop.f32.mrf.mxu0
    %v400 = vadd.f32 0.0, %v399
    %401 = vdwg.mxu0
    %v402 = vrot.slane %v380, 4
    %v403 = vadd.f32 %v380, %v402
    %v404 = vrot.slane %v403, 2
    %v405 = vadd.f32 %v403, %v404
    %v406 = vrot.slane %v405, 1
    %v407 = vadd.f32 %v405, %v406
    %v408 = vmul.f32 %v407, %v235
    %v409 = vsub.f32 %v380, %v408
    %v410 = vmul.f32 %v409, %v409
    %v411 = vrot.slane %v410, 4
    %v412 = vadd.f32 %v410, %v411
    %v413 = vrot.slane %v412, 2
    %v414 = vadd.f32 %v412, %v413
    %v415 = vrot.slane %v414, 1
    %v416 = vadd.f32 %v414, %v415
    %v417 = vmul.f32 %v416, %v235
    %v418 = vadd.f32 %v417, 1e-05
    %v419 = vrsqrt.pop %v418
    %v420 = vmul.f32 %v419, %v418
    %v421 = vmul.f32 %v420, %v419
    %v422 = vmul.f32 0.5, %v421
    %v423 = vsub.f32 1.5, %v422
    %v424 = vmul.f32 %v419, %v423
    %vm425 = vweird.f32 %v418
    %vm426 = vweird.f32 %v419
    %vm427 = vmor %vm425, %vm426
    %v428 = vsel %vm427, %v419, %v424
    %v429 = vmul.f32 %v358, %v428
    %v430 = vmul.f32 %v408, %v429
    %v431 = vsub.f32 %v360, %v430
    %v433 = vperm.slane %v429, 0
    %v435 = vmul.f32 %v380, %v433
    %v437 = vperm.slane %v431, 0
    %v439 = vadd.f32 %v435, %v437
    %v440 = vrot.slane %v400, 4
    %v441 = vadd.f32 %v400, %v440
    %v442 = vrot.slane %v441, 2
    %v443 = vadd.f32 %v441, %v442
    %v444 = vrot.slane %v443, 1
    %v445 = vadd.f32 %v443, %v444
    %v446 = vmul.f32 %v445, %v235
    %v447 = vsub.f32 %v400, %v446
    %v448 = vmul.f32 %v447, %v447
    %v449 = vrot.slane %v448, 4
    %v450 = vadd.f32 %v448, %v449
    %v451 = vrot.slane %v450, 2
    %v452 = vadd.f32 %v450, %v451
    %v453 = vrot.slane %v452, 1
    %v454 = vadd.f32 %v452, %v453
    %v455 = vmul.f32 %v454, %v235
    %v456 = vadd.f32 %v455, 1e-05
    %v457 = vrsqrt.pop %v456
    %v458 = vmul.f32 %v457, %v456
    %v459 = vmul.f32 %v458, %v457
    %v460 = vmul.f32 0.5, %v459
    %v461 = vsub.f32 1.5, %v460
    %v462 = vmul.f32 %v457, %v461
    %vm463 = vweird.f32 %v456
    %vm464 = vweird.f32 %v457
    %vm465 = vmor %vm463, %vm464
    %v466 = vsel %vm465, %v457, %v462
    %v467 = vmul.f32 %v359, %v466
    %v468 = vmul.f32 %v446, %v467
    %v469 = vsub.f32 %v361, %v468
    %v471 = vperm.slane %v467, 0
    %v473 = vmul.f32 %v400, %v471
    %v475 = vperm.slane %v469, 0
    %v477 = vadd.f32 %v473, %v475
    %v478 = vxor.u32 %v477, 2147483648
    %v479 = vmul.f32 %v478, 1.442695
    %v480 = vpow.pop %v479
    %v481 = vadd.f32 %v480, 1.0
    %v482 = vrcp.pop %v481
    %v483 = vmul.f32 %v481, %v482
    %v484 = vsub.f32 1.0, %v483
    %v485 = vmul.f32 %v482, %v484
    %v486 = vadd.f32 %v482, %v485
    %vm487 = vweird.f32 %v481
    %vm488 = vweird.f32 %v482
    %vm489 = vmor %vm487, %vm488
    %v490 = vsel %vm489, %v482, %v486
    %v491 = vand.u32 2147483647, %v481
    %vm492 = vcmp.eq.f32.partialorder %v491, 8.507059e+37
    %v493 = vand.u32 %v481, 2147483648
    %v494 = vor.u32 1.1754944e-38, %v493
    %v495 = vsel %vm492, %v494, %v490
    %v496 = vmul.f32 1.0, %v495
    %v497 = vmul.f32 %v439, %v496
    %v498 = vadd.f32 %v325, %v497
    %v499 = vmul.f32 %v498, 0.70710677
    %v500 = vld [vmem:[#allocation11] sm:$0xff]
    %v501 = vld [vmem:[#allocation11 + $0x8] sm:$0xff]
    %v502 = vld [vmem:[#allocation11 + $0x10] sm:$0xff]
    %v503 = vld [vmem:[#allocation11 + $0x18] sm:$0xff]
    %v504 = vld [vmem:[#allocation11 + $0x20] sm:$0xff]
    %v505 = vld [vmem:[#allocation11 + $0x28] sm:$0xff]
    %v506 = vld [vmem:[#allocation11 + $0x30] sm:$0xff]
    %v507 = vld [vmem:[#allocation11 + $0x38] sm:$0xff]
    %v508 = vld [vmem:[#allocation11 + $0x40] sm:$0xff]
    %v509 = vld [vmem:[#allocation11 + $0x48] sm:$0xff]
    %v510 = vld [vmem:[#allocation11 + $0x50] sm:$0xff]
    %v511 = vld [vmem:[#allocation11 + $0x58] sm:$0xff]
    %v512 = vld [vmem:[#allocation11 + $0x60] sm:$0xff]
    %v513 = vld [vmem:[#allocation11 + $0x68] sm:$0xff]
    %v514 = vld [vmem:[#allocation11 + $0x70] sm:$0xff]
    %v515 = vld [vmem:[#allocation11 + $0x78] sm:$0xff]
    %v516 = vld [vmem:[#allocation13] sm:$0xff]
    %v517 = vld [vmem:[#allocation13 + $0x8] sm:$0xff]
    %v518 = vld [vmem:[#allocation13 + $0x10] sm:$0xff]
    %v519 = vld [vmem:[#allocation13 + $0x18] sm:$0xff]
    %v520 = vld [vmem:[#allocation13 + $0x20] sm:$0xff]
    %v521 = vld [vmem:[#allocation13 + $0x28] sm:$0xff]
    %v522 = vld [vmem:[#allocation13 + $0x30] sm:$0xff]
    %v523 = vld [vmem:[#allocation13 + $0x38] sm:$0xff]
    %v524 = vld [vmem:[#allocation13 + $0x40] sm:$0xff]
    %v525 = vld [vmem:[#allocation13 + $0x48] sm:$0xff]
    %v526 = vld [vmem:[#allocation13 + $0x50] sm:$0xff]
    %v527 = vld [vmem:[#allocation13 + $0x58] sm:$0xff]
    %v528 = vld [vmem:[#allocation13 + $0x60] sm:$0xff]
    %v529 = vld [vmem:[#allocation13 + $0x68] sm:$0xff]
    %v530 = vld [vmem:[#allocation13 + $0x70] sm:$0xff]
    %v531 = vld [vmem:[#allocation13 + $0x78] sm:$0xff]
    %v532 = vld [vmem:[%s15] sm:$0x1]
    %v533 = vld [vmem:[%s16] sm:$0x1]
    %v534 = vld [vmem:[%s17] sm:$0x1]
    %v535 = vld [vmem:[%s18] sm:$0x1]
    %536 = vmatpush.msra.mxu0 %v515
    %537 = vmatpush.msra.mxu0 %v514
    %538 = vmatpush.msra.mxu0 %v513
    %539 = vmatpush.msra.mxu0 %v512
    %540 = vmatpush.msra.mxu0 %v511
    %541 = vmatpush.msra.mxu0 %v510
    %542 = vmatpush.msra.mxu0 %v509
    %543 = vmatpush.msra.mxu0 %v508
    %544 = vmatpush.msra.mxu0 %v507
    %545 = vmatpush.msra.mxu0 %v506
    %546 = vmatpush.msra.mxu0 %v505
    %547 = vmatpush.msra.mxu0 %v504
    %548 = vmatpush.msra.mxu0 %v503
    %549 = vmatpush.msra.mxu0 %v502
    %550 = vmatpush.msra.mxu0 %v501
    %551 = vmatpush.msra.mxu0 %v500
    %552 = vmatmul.f32.gmra.mxu0 %v499
    %v553 = vpop.f32.mrf.mxu0
    %v554 = vadd.f32 0.0, %v553
    %555 = vdwg.mxu0
    %556 = vmatpush.msra.mxu0 %v531
    %557 = vmatpush.msra.mxu0 %v530
    %558 = vmatpush.msra.mxu0 %v529
    %559 = vmatpush.msra.mxu0 %v528
    %560 = vmatpush.msra.mxu0 %v527
    %561 = vmatpush.msra.mxu0 %v526
    %562 = vmatpush.msra.mxu0 %v525
    %563 = vmatpush.msra.mxu0 %v524
    %564 = vmatpush.msra.mxu0 %v523
    %565 = vmatpush.msra.mxu0 %v522
    %566 = vmatpush.msra.mxu0 %v521
    %567 = vmatpush.msra.mxu0 %v520
    %568 = vmatpush.msra.mxu0 %v519
    %569 = vmatpush.msra.mxu0 %v518
    %570 = vmatpush.msra.mxu0 %v517
    %571 = vmatpush.msra.mxu0 %v516
    %572 = vmatmul.f32.gmra.mxu0 %v499
    %v573 = vpop.f32.mrf.mxu0
    %v574 = vadd.f32 0.0, %v573
    %575 = vdwg.mxu0
    %v576 = vrot.slane %v554, 4
    %v577 = vadd.f32 %v554, %v576
    %v578 = vrot.slane %v577, 2
    %v579 = vadd.f32 %v577, %v578
    %v580 = vrot.slane %v579, 1
    %v581 = vadd.f32 %v579, %v580
    %v582 = vmul.f32 %v581, %v235
    %v583 = vsub.f32 %v554, %v582
    %v584 = vmul.f32 %v583, %v583
    %v585 = vrot.slane %v584, 4
    %v586 = vadd.f32 %v584, %v585
    %v587 = vrot.slane %v586, 2
    %v588 = vadd.f32 %v586, %v587
    %v589 = vrot.slane %v588, 1
    %v590 = vadd.f32 %v588, %v589
    %v591 = vmul.f32 %v590, %v235
    %v592 = vadd.f32 %v591, 1e-05
    %v593 = vrsqrt.pop %v592
    %v594 = vmul.f32 %v593, %v592
    %v595 = vmul.f32 %v594, %v593
    %v596 = vmul.f32 0.5, %v595
    %v597 = vsub.f32 1.5, %v596
    %v598 = vmul.f32 %v593, %v597
    %vm599 = vweird.f32 %v592
    %vm600 = vweird.f32 %v593
    %vm601 = vmor %vm599, %vm600
    %v602 = vsel %vm601, %v593, %v598
    %v603 = vmul.f32 %v532, %v602
    %v604 = vmul.f32 %v582, %v603
    %v605 = vsub.f32 %v534, %v604
    %v607 = vperm.slane %v603, 0
    %v609 = vmul.f32 %v554, %v607
    %v611 = vperm.slane %v605, 0
    %v613 = vadd.f32 %v609, %v611
    %v614 = vrot.slane %v574, 4
    %v615 = vadd.f32 %v574, %v614
    %v616 = vrot.slane %v615, 2
    %v617 = vadd.f32 %v615, %v616
    %v618 = vrot.slane %v617, 1
    %v619 = vadd.f32 %v617, %v618
    %v620 = vmul.f32 %v619, %v235
    %v621 = vsub.f32 %v574, %v620
    %v622 = vmul.f32 %v621, %v621
    %v623 = vrot.slane %v622, 4
    %v624 = vadd.f32 %v622, %v623
    %v625 = vrot.slane %v624, 2
    %v626 = vadd.f32 %v624, %v625
    %v627 = vrot.slane %v626, 1
    %v628 = vadd.f32 %v626, %v627
    %v629 = vmul.f32 %v628, %v235
    %v630 = vadd.f32 %v629, 1e-05
    %v631 = vrsqrt.pop %v630
    %v632 = vmul.f32 %v631, %v630
    %v633 = vmul.f32 %v632, %v631
    %v634 = vmul.f32 0.5, %v633
    %v635 = vsub.f32 1.5, %v634
    %v636 = vmul.f32 %v631, %v635
    %vm637 = vweird.f32 %v630
    %vm638 = vweird.f32 %v631
    %vm639 = vmor %vm637, %vm638
    %v640 = vsel %vm639, %v631, %v636
    %v641 = vmul.f32 %v533, %v640
    %v642 = vmul.f32 %v620, %v641
    %v643 = vsub.f32 %v535, %v642
    %v645 = vperm.slane %v641, 0
    %v647 = vmul.f32 %v574, %v645
    %v649 = vperm.slane %v643, 0
    %v651 = vadd.f32 %v647, %v649
    %v652 = vxor.u32 %v651, 2147483648
    %v653 = vmul.f32 %v652, 1.442695
    %v654 = vpow.pop %v653
    %v655 = vadd.f32 %v654, 1.0
    %v656 = vrcp.pop %v655
    %v657 = vmul.f32 %v655, %v656
    %v658 = vsub.f32 1.0, %v657
    %v659 = vmul.f32 %v656, %v658
    %v660 = vadd.f32 %v656, %v659
    %vm661 = vweird.f32 %v655
    %vm662 = vweird.f32 %v656
    %vm663 = vmor %vm661, %vm662
    %v664 = vsel %vm663, %v656, %v660
    %v665 = vand.u32 2147483647, %v655
    %vm666 = vcmp.eq.f32.partialorder %v665, 8.507059e+37
    %v667 = vand.u32 %v655, 2147483648
    %v668 = vor.u32 1.1754944e-38, %v667
    %v669 = vsel %vm666, %v668, %v664
    %v670 = vmul.f32 1.0, %v669
    %v671 = vmul.f32 %v613, %v670
    %v672 = vadd.f32 %v499, %v671
    %v673 = vmul.f32 %v672, 0.70710677
    %674 = vst [vmem:[#allocation14] sm:$0xff] %v673
    // Predicated region
    $region106: #{tpu_custom_call.1} parent=1 // pred_check
      _
    $region107: #{tpu_custom_call.1} parent=1 // pred_check_branch
      %676 = sbr.rel (0) target = $region109
    $region108: #{tpu_custom_call.1} parent=1 // pred_region
      %678 = vsyncadd [#allocation4], 0
      %s680 = sshll.u32 [#allocation14], 4
      %s681 = int_to_ptr.vmem [resolvable:$true] %s680
      %s682 = sshll.u32 %s19, 4
      %s683 = int_to_ptr.hbm [resolvable:$true] %s682
      %685 = dma.vmem_to_hbm [thread:$0]  %s681, 128, %s683, [#allocation4]
    $region109: #{tpu_custom_call.1} parent=1 // pred_fallthru
      _
    // Predicated region
    $region110: #{tpu_custom_call.1} parent=1 // pred_check
      _
    $region111: #{tpu_custom_call.1} parent=1 // pred_check_branch
      %687 = sbr.rel (0) target = $region113
    $region112: #{tpu_custom_call.1} parent=1 // pred_region
      %689 = dma.done [#allocation4], 128
    $region113: #{tpu_custom_call.1} parent=1 // pred_fallthru
      _
    %690 = vsyncpa [#allocation3], 1
    %691 = vsyncpa [#allocation6], 1
    %692 = vsyncpa [#allocation9], 1
    %693 = vsyncpa [#allocation12], 1
    %694 = vsyncpa [#allocation4], 1

</llo_original>
